<compile_context>
chip_gen: v6e
topology: v6e:2x2x1
jax: 0.10.0
libtpu: 0.0.40
codegen_flags: <defaults>
</compile_context>

<pallas_src>
import functools

import jax
import jax.numpy as jnp
from jax import lax
from jax.experimental import pallas as pl
from jax.experimental.pallas import tpu as pltpu

EPS = 1e-12
_LANES = 128
_DEFAULT_BLOCK_ROWS = 4096   # 4096 * 128 * 4 B = 2 MiB per f32 input block
_SUB_ROWS = 512              # inner sub-tile: bounds live f32 temporaries to ~2 MiB


def _num_tensorcores():
    """Best-effort TensorCores-per-device (v5e/v6e: 1; v4/v5p/v7x megacore: 2)."""
    try:
        info = pltpu.get_tpu_info()
        for name in ("num_cores", "core_count", "num_tensorcores",
                     "tensor_core_count", "cores_per_chip"):
            v = getattr(info, name, None)
            if v is not None:
                v = int(v)
                if v >= 1:
                    return v
    except Exception:
        pass
    try:
        kind = jax.devices()[0].device_kind.lower()
        if ("lite" in kind or "v5e" in kind or "v6e" in kind
                or "v2" in kind or "v3" in kind):
            return 1
    except Exception:
        pass
    return 2


def _focal_kernel(pred_ref, gt_ref, out_ref, loss_acc, npos_acc, *,
                  k_per_core, tm, sub_rows, valid_rows, need_mask):
    k = pl.program_id(1)

    # Zero per-core accumulators at the start of each core's sweep.
    @pl.when(k == 0)
    def _():
        loss_acc[...] = jnp.zeros_like(loss_acc)
        npos_acc[...] = jnp.zeros_like(npos_acc)

    # Unclamped global row offset of this block (clamped idx only affects the DMA).
    block_start = (pl.program_id(0) * k_per_core + k) * tm
    n_sub = tm // sub_rows

    def accumulate(pred, gt):
        # pred / gt: (sub_rows, 128) f32.
        is_pos = gt == 1.0
        one_m_pred = 1.0 - pred
        # Single transcendental per element: pos / neg branches are disjoint.
        logv = jnp.log(jnp.where(is_pos, pred + EPS, one_m_pred + EPS))
        # Combined CornerNet weight, selected per element:
        #   pos: (1-pred+eps)^2      neg: (pred+eps)^2 * (1-gt)^4
        w = jnp.where(is_pos,
                      (one_m_pred + EPS) ** 2,
                      (pred + EPS) ** 2 * (1.0 - gt) ** 4)
        loss = logv * w
        pos = is_pos.astype(jnp.float32)
        # (sub_rows,128) -> (8,128): layout-preserving reshape + pure VALU adds.
        loss_acc[...] += loss.reshape(sub_rows // 8, 8, _LANES).sum(axis=0)
        npos_acc[...] += pos.reshape(sub_rows // 8, 8, _LANES).sum(axis=0)

    def process(off):
        pred = pred_ref[pl.ds(off, sub_rows), :].astype(jnp.float32)
        gt = gt_ref[pl.ds(off, sub_rows), :].astype(jnp.float32)
        if not need_mask:
            accumulate(pred, gt)
            return

        start = block_start + off
        # Edge = ragged tail of the true last block, or a duplicated (clamped) block.
        is_edge = start + sub_rows > valid_rows

        @pl.when(jnp.logical_not(is_edge))
        def _():
            accumulate(pred, gt)          # fast path: no iota / selects

        @pl.when(is_edge)
        def _():
            row = lax.broadcasted_iota(jnp.int32, (sub_rows, _LANES), 0)
            valid = (start + row) < valid_rows
            # Select (not multiply): rows past valid_rows may hold garbage/NaN.
            # (pred=0, gt=0) contributes exactly zero loss and zero npos.
            accumulate(jnp.where(valid, pred, 0.0), jnp.where(valid, gt, 0.0))

    if n_sub == 1:
        process(0)
    else:
        @pl.loop(0, n_sub)
        def _(s):
            process(pl.multiple_of(s * sub_rows, sub_rows))

    # Cross-lane reduction + SMEM store only once, at the end of this core's sweep.
    @pl.when(k == pl.num_programs(1) - 1)
    def _():
        out_ref[0, 0] = jnp.sum(loss_acc[...])
        out_ref[0, 1] = jnp.sum(npos_acc[...])


def centernet_focal_loss(pred, gt, *, block_rows=_DEFAULT_BLOCK_ROWS):
    """pred, gt: (B, C, H, W) arrays (any float dtype). Returns scalar f32 loss."""
    assert pred.shape == gt.shape
    pred_f = pred.reshape(-1)   # free reshape; keep native dtype (no HBM upcast)
    gt_f = gt.reshape(-1)
    n = pred_f.shape[0]

    # Flatten to (rows, 128) lane-dense layout; rows kept a multiple of 8 sublanes.
    # Zero-padding contributes exactly zero loss / zero npos under the combined
    # formula (log(1+eps) == 0 in f32), so no sentinel values are needed.
    chunk = 8 * _LANES
    n_pad = pl.cdiv(n, chunk) * chunk
    if n_pad != n:
        pred_f = jnp.pad(pred_f, (0, n_pad - n))
        gt_f = jnp.pad(gt_f, (0, n_pad - n))
    pred2 = pred_f.reshape(-1, _LANES)
    gt2 = gt_f.reshape(-1, _LANES)
    m_rows = pred2.shape[0]

    tm = min(block_rows, m_rows)          # multiple of 8 either way
    assert tm % 8 == 0, "block_rows must be a multiple of 8"
    num_blocks = pl.cdiv(m_rows, tm)
    ncores = max(1, min(_num_tensorcores(), num_blocks))
    k_per_core = pl.cdiv(num_blocks, ncores)
    need_mask = (ncores * k_per_core != num_blocks) or (num_blocks * tm != m_rows)
    sub_rows = _SUB_ROWS if tm % _SUB_ROWS == 0 else tm

    def idx_map(p, k):
        # Clamp so duplicated trailing iterations re-read an in-bounds block;
        # the in-kernel edge mask zeroes their contribution.
        return (jnp.minimum(p * k_per_core + k, num_blocks - 1), 0)

    kernel = functools.partial(
        _focal_kernel,
        k_per_core=k_per_core, tm=tm, sub_rows=sub_rows,
        valid_rows=m_rows, need_mask=need_mask)

    # NOTE(v7x): if xprof shows axis 0 is not sharded across the two TensorCores,
    # switch its semantic to pltpu.CORE_PARALLEL (grid axis 0 already == ncores).
    partials = pl.pallas_call(
        kernel,
        out_shape=jax.ShapeDtypeStruct((ncores, 2), jnp.float32),
        grid_spec=pltpu.PrefetchScalarGridSpec(
            num_scalar_prefetch=0,
            grid=(ncores, k_per_core),
            in_specs=[
                pl.BlockSpec((tm, _LANES), idx_map),
                pl.BlockSpec((tm, _LANES), idx_map),
            ],
            out_specs=pl.BlockSpec((1, 2), lambda p, k: (p, 0),
                                   memory_space=pltpu.SMEM),
            scratch_shapes=[pltpu.VMEM((8, _LANES), jnp.float32),
                            pltpu.VMEM((8, _LANES), jnp.float32)],
        ),
        compiler_params=pltpu.CompilerParams(
            dimension_semantics=("parallel", "arbitrary"),
            vmem_limit_bytes=32 * 1024 * 1024,
        ),
    )(pred2, gt2)

    loss_s = jnp.sum(partials[:, 0])
    npos_s = jnp.sum(partials[:, 1])
    # PyTorch: if num_pos == 0: -neg_loss else -(pos+neg)/num_pos.
    # When npos == 0 the pos contribution is already zero, so one guarded divide
    # covers both branches.
    return -loss_s / jnp.maximum(npos_s, 1.0)


def _ref_loss(pred, gt):
    """Pure-JAX reference mirroring the PyTorch _neg_loss."""
    pred = pred.astype(jnp.float32)
    gt = gt.astype(jnp.float32)
    pos_inds = (gt == 1.0).astype(jnp.float32)
    neg_inds = (gt < 1.0).astype(jnp.float32)
    neg_weights = (1.0 - gt) ** 4
    pos_loss = jnp.log(pred + EPS) * (1.0 - pred + EPS) ** 2 * pos_inds
    neg_loss = jnp.log(1.0 - pred + EPS) * (pred + EPS) ** 2 * neg_weights * neg_inds
    num_pos = pos_inds.sum()
    pos_loss = pos_loss.sum()
    neg_loss = neg_loss.sum()
    return jnp.where(
        num_pos == 0.0, -neg_loss, -(pos_loss + neg_loss) / jnp.maximum(num_pos, 1.0)
    )


def _make_inputs(key, shape):
    k1, k2, k3 = jax.random.split(key, 3)
    pred = jax.nn.sigmoid(jax.random.normal(k1, shape, dtype=jnp.float32))
    gt = jax.random.uniform(k2, shape, dtype=jnp.float32, minval=0.0, maxval=0.99)
    peak_mask = jax.random.uniform(k3, shape) > 0.97
    gt = jnp.where(peak_mask, jnp.float32(1.0), gt)
    return pred, gt


if __name__ == "__main__":
    key = jax.random.PRNGKey(0)
    ka, kb = jax.random.split(key)

    # Case 1: standard small NCHW heatmap (numel divisible by 1024 -> no pad path).
    pred, gt = _make_inputs(ka, (2, 4, 16, 16))
    loss = jax.block_until_ready(jax.jit(centernet_focal_loss)(pred, gt))
    ref = _ref_loss(pred, gt)
    assert jnp.allclose(loss, ref, rtol=1e-5, atol=1e-5), (loss, ref)

    # Case 2: ragged shape + small forced block to exercise the pad fallback,
    # the gated edge-row select path, block-index clamping and the parallel split.
    pred2, gt2 = _make_inputs(kb, (2, 4, 24, 24))
    loss2 = jax.block_until_ready(
        jax.jit(functools.partial(centernet_focal_loss, block_rows=16))(pred2, gt2))
    ref2 = _ref_loss(pred2, gt2)
    assert jnp.allclose(loss2, ref2, rtol=1e-5, atol=1e-5), (loss2, ref2)

    print("KERNEL_OK")
</pallas_src>

<mosaic_0001>
module attributes {stable_mosaic.version = 11 : i64} {
  func.func @_focal_kernel(%arg0: i32, %arg1: i32, %arg2: memref<16x128xf32, #tpu.memory_space<vmem>>, %arg3: memref<16x128xf32, #tpu.memory_space<vmem>>, %arg4: memref<1x2xf32, #tpu.memory_space<smem>>, %arg5: memref<8x128xf32, #tpu.memory_space<vmem>>, %arg6: memref<8x128xf32, #tpu.memory_space<vmem>>) attributes {dimension_semantics = [#tpu.dimension_semantics<parallel>, #tpu.dimension_semantics<arbitrary>], iteration_bounds = array<i64: 1, 1>, scalar_prefetch = 0 : i64, scratch_operands = 2 : i64, tpu.core_type = #tpu.core_type<tc>, window_params = [{transform_indices = @transform_0, window_bounds = array<i64: 16, 128>}, {transform_indices = @transform_1, window_bounds = array<i64: 16, 128>}, {transform_indices = @transform_2, window_bounds = array<i64: 1, 2>}]} {
    %c0_i32 = arith.constant 0 : i32
    %0 = arith.cmpi eq, %arg1, %c0_i32 : i32
    %1 = arith.extui %0 : i1 to i32
    %c0_i32_0 = arith.constant 0 : i32
    %2 = arith.cmpi ne, %1, %c0_i32_0 : i32
    scf.if %2 {
      %cst_22 = arith.constant 0.000000e+00 : f32
      %43 = vector.broadcast %cst_22 : f32 to vector<8x128xf32>
      %c0_23 = arith.constant 0 : index
      %c0_24 = arith.constant 0 : index
      %44 = vector.load %arg5[%c0_23, %c0_24] : memref<8x128xf32, #tpu.memory_space<vmem>>, vector<8x128xf32>
      tpu.vector_store %arg5[%c0_23, %c0_24], %43 {strides = array<i32>} : memref<8x128xf32, #tpu.memory_space<vmem>>, vector<8x128xf32>,
      %cst_25 = arith.constant 0.000000e+00 : f32
      %45 = vector.broadcast %cst_25 : f32 to vector<8x128xf32>
      %c0_26 = arith.constant 0 : index
      %c0_27 = arith.constant 0 : index
      %46 = vector.load %arg6[%c0_26, %c0_27] : memref<8x128xf32, #tpu.memory_space<vmem>>, vector<8x128xf32>
      tpu.vector_store %arg6[%c0_26, %c0_27], %45 {strides = array<i32>} : memref<8x128xf32, #tpu.memory_space<vmem>>, vector<8x128xf32>,
    } else {
    }
    %c0 = arith.constant 0 : index
    %c0_1 = arith.constant 0 : index
    %3 = vector.load %arg2[%c0, %c0_1] : memref<16x128xf32, #tpu.memory_space<vmem>>, vector<16x128xf32>
    %c0_2 = arith.constant 0 : index
    %c0_3 = arith.constant 0 : index
    %4 = vector.load %arg3[%c0_2, %c0_3] : memref<16x128xf32, #tpu.memory_space<vmem>>, vector<16x128xf32>
    %cst = arith.constant 1.000000e+00 : f32
    %5 = vector.broadcast %cst : f32 to vector<16x128xf32>
    %6 = arith.cmpf oeq, %4, %5 : vector<16x128xf32>
    %cst_4 = arith.constant 1.000000e+00 : f32
    %7 = vector.broadcast %cst_4 : f32 to vector<16x128xf32>
    %8 = arith.subf %7, %3 : vector<16x128xf32>
    %cst_5 = arith.constant 9.99999996E-13 : f32
    %9 = vector.broadcast %cst_5 : f32 to vector<16x128xf32>
    %10 = arith.addf %3, %9 : vector<16x128xf32>
    %cst_6 = arith.constant 9.99999996E-13 : f32
    %11 = vector.broadcast %cst_6 : f32 to vector<16x128xf32>
    %12 = arith.addf %8, %11 : vector<16x128xf32>
    %13 = arith.select %6, %10, %12 : vector<16x128xi1>, vector<16x128xf32>
    %14 = math.log %13 : vector<16x128xf32>
    %cst_7 = arith.constant 9.99999996E-13 : f32
    %15 = vector.broadcast %cst_7 : f32 to vector<16x128xf32>
    %16 = arith.addf %8, %15 : vector<16x128xf32>
    %17 = arith.mulf %16, %16 : vector<16x128xf32>
    %cst_8 = arith.constant 9.99999996E-13 : f32
    %18 = vector.broadcast %cst_8 : f32 to vector<16x128xf32>
    %19 = arith.addf %3, %18 : vector<16x128xf32>
    %20 = arith.mulf %19, %19 : vector<16x128xf32>
    %cst_9 = arith.constant 1.000000e+00 : f32
    %21 = vector.broadcast %cst_9 : f32 to vector<16x128xf32>
    %22 = arith.subf %21, %4 : vector<16x128xf32>
    %23 = arith.mulf %22, %22 : vector<16x128xf32>
    %24 = arith.mulf %23, %23 : vector<16x128xf32>
    %25 = arith.mulf %20, %24 : vector<16x128xf32>
    %26 = arith.select %6, %17, %25 : vector<16x128xi1>, vector<16x128xf32>
    %27 = arith.mulf %14, %26 : vector<16x128xf32>
    %28 = arith.extui %6 : vector<16x128xi1> to vector<16x128xi32>
    %29 = arith.sitofp %28 : vector<16x128xi32> to vector<16x128xf32>
    %c0_10 = arith.constant 0 : index
    %c0_11 = arith.constant 0 : index
    %30 = vector.load %arg5[%c0_10, %c0_11] : memref<8x128xf32, #tpu.memory_space<vmem>>, vector<8x128xf32>
    %31 = vector.shape_cast %27 : vector<16x128xf32> to vector<2x8x128xf32>
    %cst_12 = arith.constant dense<0.000000e+00> : vector<8x128xf32>
    %32 = vector.multi_reduction <add>, %31, %cst_12 [0] : vector<2x8x128xf32> to vector<8x128xf32>
    %33 = arith.addf %30, %32 : vector<8x128xf32>
    %c0_13 = arith.constant 0 : index
    %c0_14 = arith.constant 0 : index
    %34 = vector.load %arg5[%c0_13, %c0_14] : memref<8x128xf32, #tpu.memory_space<vmem>>, vector<8x128xf32>
    tpu.vector_store %arg5[%c0_13, %c0_14], %33 {strides = array<i32>} : memref<8x128xf32, #tpu.memory_space<vmem>>, vector<8x128xf32>,
    %c0_15 = arith.constant 0 : index
    %c0_16 = arith.constant 0 : index
    %35 = vector.load %arg6[%c0_15, %c0_16] : memref<8x128xf32, #tpu.memory_space<vmem>>, vector<8x128xf32>
    %36 = vector.shape_cast %29 : vector<16x128xf32> to vector<2x8x128xf32>
    %cst_17 = arith.constant dense<0.000000e+00> : vector<8x128xf32>
    %37 = vector.multi_reduction <add>, %36, %cst_17 [0] : vector<2x8x128xf32> to vector<8x128xf32>
    %38 = arith.addf %35, %37 : vector<8x128xf32>
    %c0_18 = arith.constant 0 : index
    %c0_19 = arith.constant 0 : index
    %39 = vector.load %arg6[%c0_18, %c0_19] : memref<8x128xf32, #tpu.memory_space<vmem>>, vector<8x128xf32>
    tpu.vector_store %arg6[%c0_18, %c0_19], %38 {strides = array<i32>} : memref<8x128xf32, #tpu.memory_space<vmem>>, vector<8x128xf32>,
    %c0_i32_20 = arith.constant 0 : i32
    %40 = arith.cmpi eq, %arg1, %c0_i32_20 : i32
    %41 = arith.extui %40 : i1 to i32
    %c0_i32_21 = arith.constant 0 : i32
    %42 = arith.cmpi ne, %41, %c0_i32_21 : i32
    scf.if %42 {
      %c0_22 = arith.constant 0 : index
      %c0_23 = arith.constant 0 : index
      %43 = vector.load %arg5[%c0_22, %c0_23] : memref<8x128xf32, #tpu.memory_space<vmem>>, vector<8x128xf32>
      %44 = vector.shape_cast %43 : vector<8x128xf32> to vector<1x8x128xf32>
      %cst_24 = arith.constant dense<0.000000e+00> : vector<1xf32>
      %45 = vector.multi_reduction <add>, %44, %cst_24 [1, 2] : vector<1x8x128xf32> to vector<1xf32>
      %46 = vector.shape_cast %45 : vector<1xf32> to vector<1x1x1xf32>
      %47 = vector.extract %46[0, 0, 0] : f32 from vector<1x1x1xf32>
      %c0_25 = arith.constant 0 : index
      %c0_26 = arith.constant 0 : index
      %48 = memref.load %arg4[%c0_25, %c0_26] : memref<1x2xf32, #tpu.memory_space<smem>>
      memref.store %47, %arg4[%c0_25, %c0_26] : memref<1x2xf32, #tpu.memory_space<smem>>
      %c0_27 = arith.constant 0 : index
      %c0_28 = arith.constant 0 : index
      %49 = vector.load %arg6[%c0_27, %c0_28] : memref<8x128xf32, #tpu.memory_space<vmem>>, vector<8x128xf32>
      %50 = vector.shape_cast %49 : vector<8x128xf32> to vector<1x8x128xf32>
      %cst_29 = arith.constant dense<0.000000e+00> : vector<1xf32>
      %51 = vector.multi_reduction <add>, %50, %cst_29 [1, 2] : vector<1x8x128xf32> to vector<1xf32>
      %52 = vector.shape_cast %51 : vector<1xf32> to vector<1x1x1xf32>
      %53 = vector.extract %52[0, 0, 0] : f32 from vector<1x1x1xf32>
      %c0_30 = arith.constant 0 : index
      %c1 = arith.constant 1 : index
      %54 = memref.load %arg4[%c0_30, %c1] : memref<1x2xf32, #tpu.memory_space<smem>>
      memref.store %53, %arg4[%c0_30, %c1] : memref<1x2xf32, #tpu.memory_space<smem>>
    } else {
    }
    return
  }
  func.func @transform_0(%arg0: i32, %arg1: i32) -> (i32, i32) {
    %c1_i32 = arith.constant 1 : i32
    %0 = arith.muli %arg0, %c1_i32 : i32
    %1 = arith.addi %0, %arg1 : i32
    %c0_i32 = arith.constant 0 : i32
    %2 = arith.minsi %1, %c0_i32 : i32
    %c0_i32_0 = arith.constant 0 : i32
    %c0_i32_1 = arith.constant 0 : i32
    return %2, %c0_i32_0 : i32, i32
  }
  func.func @transform_1(%arg0: i32, %arg1: i32) -> (i32, i32) {
    %c1_i32 = arith.constant 1 : i32
    %0 = arith.muli %arg0, %c1_i32 : i32
    %1 = arith.addi %0, %arg1 : i32
    %c0_i32 = arith.constant 0 : i32
    %2 = arith.minsi %1, %c0_i32 : i32
    %c0_i32_0 = arith.constant 0 : i32
    %c0_i32_1 = arith.constant 0 : i32
    return %2, %c0_i32_0 : i32, i32
  }
  func.func @transform_2(%arg0: i32, %arg1: i32) -> (i32, i32) {
    %c0_i32 = arith.constant 0 : i32
    %c0_i32_0 = arith.constant 0 : i32
    return %arg0, %c0_i32 : i32, i32
  }
}

</mosaic_0001>

<llo_original>
// kernel: centernet_focal_loss.1
$region0: #{centernet_focal_loss.1}
  #allocation0 [shape = 'u32[]', space=smem, size = 0x4, offset = 0x4, fixed_abs, tag = 'smem constant byte address 0x4 - core index']
  #allocation1 [shape = 'u32[144,128]{1,0:T(1,128)}', space=vmem, size = 0x12000, scoped, tag = 'internal scratch']
  #allocation2 [shape = 'f32[8,128]{1,0:T(8,128)}', space=vmem, size = 0x1000, scoped, tag = 'scratch operand']
  #allocation3 [shape = 'f32[8,128]{1,0:T(8,128)}', space=vmem, size = 0x1000, scoped, tag = 'scratch operand']
  %s0 = inlined_call_operand.vmem [shape: f32[16,128], index: 0, kind: input, shape index: {}]
  %s1 = inlined_call_operand.vmem [shape: f32[16,128], index: 1, kind: input, shape index: {}]
  %s2 = inlined_call_operand.vmem [shape: f32[1,2], index: 2, kind: output, shape index: {}]
  %s3 = sld [smem:[#allocation0]]
  $region26: #{centernet_focal_loss.1} parent=0
    _
  %s5 = ssub.s32 1, %s3
  %s6 = scalar_select 0, %s5, %s3
  $region1: #{centernet_focal_loss.1} parent=0
    #allocation4 [shape = 'u8[512]{0}', space=smem, size = 0x200, scoped, tag = 'output window, operand 0, single buffered']
    #allocation5 [shape = 's32[1]{0}', space=sflag, size = 0x4, scoped, tag = 'scoped memory for centernet_focal_loss.1']
    %7 = vsyncpa [#allocation5], 0
    // Predicated region
    $region2: #{centernet_focal_loss.1} parent=1 // pred_check
      _
    $region3: #{centernet_focal_loss.1} parent=1 // pred_check_branch
      %9 = sbr.rel (0) target = $region5
    $region4: #{centernet_focal_loss.1} parent=1 // pred_region
      %s10 = sadd.s32 0, 0
      %p11 = scmp.lt.s32.totalorder %s10, 0
      %s12 = scalar_select %p11, %s10, 0
      %s13 = smul.u32 2, %s12
      %p14 = scmp.lt.s32.totalorder %s13, 1
      %s15 = scalar_select %p14, %s13, 1
      %s16 = smul.addr %s15, 8
      %s17 = scalar_lea.vmem %s0, %s16
      %s18 = sadd.s32 0, 0
      %p19 = scmp.lt.s32.totalorder %s18, 0
      %s20 = scalar_select %p19, %s18, 0
      %s21 = smul.u32 2, %s20
    $region5: #{centernet_focal_loss.1} parent=1 // pred_fallthru
      _
    // Predicated region
    $region6: #{centernet_focal_loss.1} parent=1 // pred_check
      _
    $region7: #{centernet_focal_loss.1} parent=1 // pred_check_branch
      %23 = sbr.rel (0) target = $region9
    $region8: #{centernet_focal_loss.1} parent=1 // pred_region
      %s24 = sadd.s32 0, 0
      %p25 = scmp.lt.s32.totalorder %s24, 0
      %s26 = scalar_select %p25, %s24, 0
      %s27 = smul.u32 2, %s26
      %p28 = scmp.lt.s32.totalorder %s27, 1
      %s29 = scalar_select %p28, %s27, 1
      %s30 = smul.addr %s29, 8
      %s31 = scalar_lea.vmem %s1, %s30
      %s32 = sadd.s32 0, 0
      %p33 = scmp.lt.s32.totalorder %s32, 0
      %s34 = scalar_select %p33, %s32, 0
      %s35 = smul.u32 2, %s34
    $region9: #{centernet_focal_loss.1} parent=1 // pred_fallthru
      _
    %s36 = sadd.s32 0, 0
    %p37 = scmp.lt.s32.totalorder %s36, 0
    %s38 = scalar_select %p37, %s36, 0
    %s39 = smul.u32 2, %s38
    %p40 = scmp.lt.s32.totalorder %s39, 1
    %s41 = scalar_select %p40, %s39, 1
    %s42 = smul.addr %s41, 8
    %s43 = scalar_lea.vmem %s0, %s42
    %s44 = sadd.s32 0, 0
    %p45 = scmp.lt.s32.totalorder %s44, 0
    %s46 = scalar_select %p45, %s44, 0
    %s47 = smul.u32 2, %s46
    %p48 = scmp.lt.s32.totalorder %s47, 1
    %s49 = scalar_select %p48, %s47, 1
    %s50 = smul.addr %s49, 8
    %s51 = scalar_lea.vmem %s1, %s50
    %s52 = sadd.s32 0, 0
    %p53 = scmp.lt.s32.totalorder %s52, 0
    %s54 = scalar_select %p53, %s52, 0
    %s55 = smul.u32 2, %s54
    %p56 = scmp.lt.s32.totalorder %s55, 1
    %s57 = scalar_select %p56, %s55, 1
    %s58 = smul.addr %s57, 8
    %s59 = scalar_lea.vmem %s0, %s58
    %s60 = sadd.s32 0, 0
    %p61 = scmp.lt.s32.totalorder %s60, 0
    %s62 = scalar_select %p61, %s60, 0
    %s63 = smul.u32 2, %s62
    %s64 = sadd.s32 0, 0
    %p65 = scmp.lt.s32.totalorder %s64, 0
    %s66 = scalar_select %p65, %s64, 0
    %s67 = smul.u32 2, %s66
    %p68 = scmp.lt.s32.totalorder %s67, 1
    %s69 = scalar_select %p68, %s67, 1
    %s70 = smul.addr %s69, 8
    %s71 = scalar_lea.vmem %s1, %s70
    %s72 = sadd.s32 0, 0
    %p73 = scmp.lt.s32.totalorder %s72, 0
    %s74 = scalar_select %p73, %s72, 0
    %s75 = smul.u32 2, %s74
    %p76 = scmp.eq.s32.totalorder 0, 0
    // Predicated region
    $region10: #{centernet_focal_loss.1} parent=1 // pred_check
      %p77 = pneg %p76
    $region11: #{centernet_focal_loss.1} parent=1 // pred_check_branch
      %79 = sbr.rel (%p77) target = $region13
    $region12: #{centernet_focal_loss.1} parent=1 // pred_region
      %80 = vst [vmem:[#allocation2] sm:$0xff] 0.0
      %81 = vst [vmem:[#allocation3] sm:$0xff] 0.0
    $region13: #{centernet_focal_loss.1} parent=1 // pred_fallthru
      _
    %v82 = vld [vmem:[%s59] sm:$0xff]
    %v83 = vld [vmem:[%s59 + $0x8] sm:$0xff]
    %v84 = vld [vmem:[%s71] sm:$0xff]
    %v85 = vld [vmem:[%s71 + $0x8] sm:$0xff]
    %vm86 = vcmp.eq.f32.partialorder %v84, 1.0
    %vm87 = vcmp.eq.f32.partialorder %v85, 1.0
    %v88 = vsub.f32 1.0, %v82
    %v89 = vsub.f32 1.0, %v83
    %v90 = vadd.f32 %v82, 1e-12
    %v91 = vadd.f32 %v83, 1e-12
    %v92 = vadd.f32 %v88, 1e-12
    %v93 = vadd.f32 %v89, 1e-12
    %v94 = vsel %vm86, %v90, %v92
    %v95 = vsel %vm87, %v91, %v93
    %v96 = vlog2.pop %v94
    %v97 = vmul.f32 %v96, 0.6931472
    %v98 = vlog2.pop %v95
    %v99 = vmul.f32 %v98, 0.6931472
    %v100 = vmul.f32 %v92, %v92
    %v101 = vmul.f32 %v93, %v93
    %v102 = vmul.f32 %v90, %v90
    %v103 = vmul.f32 %v91, %v91
    %v104 = vsub.f32 1.0, %v84
    %v105 = vsub.f32 1.0, %v85
    %v106 = vmul.f32 %v104, %v104
    %v107 = vmul.f32 %v105, %v105
    %v108 = vmul.f32 %v106, %v106
    %v109 = vmul.f32 %v107, %v107
    %v110 = vmul.f32 %v102, %v108
    %v111 = vmul.f32 %v103, %v109
    %v112 = vsel %vm86, %v100, %v110
    %v113 = vsel %vm87, %v101, %v111
    %v114 = vmul.f32 %v97, %v112
    %v115 = vmul.f32 %v99, %v113
    %v116 = vsel %vm86, 1, 0
    %v117 = vsel %vm87, 1, 0
    %v118 = vcvt.s32.f32 %v116
    %v119 = vcvt.s32.f32 %v117
    %v120 = vld [vmem:[#allocation2] sm:$0xff]
    %v121 = vadd.f32 %v114, %v115
    %v122 = vadd.f32 %v120, %v121
    %123 = vst [vmem:[#allocation2] sm:$0xff] %v122
    %v124 = vld [vmem:[#allocation3] sm:$0xff]
    %v125 = vadd.f32 %v118, %v119
    %v126 = vadd.f32 %v124, %v125
    %127 = vst [vmem:[#allocation3] sm:$0xff] %v126
    // Predicated region
    $region14: #{centernet_focal_loss.1} parent=1 // pred_check
      %p128 = pneg %p76
    $region15: #{centernet_focal_loss.1} parent=1 // pred_check_branch
      %130 = sbr.rel (%p128) target = $region17
    $region16: #{centernet_focal_loss.1} parent=1 // pred_region
      %v131 = vld [vmem:[#allocation2] sm:$0xff]
      %132 = vadd.xlane.f32.xlu0 %v131
      %v133 = vpop.xlane.xlu0 %132
      %v134 = vrot.slane %v133, 4
      %v135 = vadd.f32 %v133, %v134
      %v136 = vrot.slane %v135, 2
      %v137 = vadd.f32 %v135, %v136
      %v138 = vrot.slane %v137, 1
      %v139 = vadd.f32 %v137, %v138
      %s140 = vtos %v139
      %s141 = scalar_lea.smem [#allocation4], 0
      %142 = sst [smem:[%s141]] %s140
      %v143 = vld [vmem:[#allocation3] sm:$0xff]
      %144 = vadd.xlane.f32.xlu0 %v143
      %v145 = vpop.xlane.xlu0 %144
      %v146 = vrot.slane %v145, 4
      %v147 = vadd.f32 %v145, %v146
      %v148 = vrot.slane %v147, 2
      %v149 = vadd.f32 %v147, %v148
      %v150 = vrot.slane %v149, 1
      %v151 = vadd.f32 %v149, %v150
      %s152 = vtos %v151
      %s153 = scalar_lea.smem [#allocation4], 1
      %154 = sst [smem:[%s153]] %s152
    $region17: #{centernet_focal_loss.1} parent=1 // pred_fallthru
      _
    // Predicated region
    $region18: #{centernet_focal_loss.1} parent=1 // pred_check
      _
    $region19: #{centernet_focal_loss.1} parent=1 // pred_check_branch
      %156 = sbr.rel (0) target = $region21
    $region20: #{centernet_focal_loss.1} parent=1 // pred_region
      %s158 = ssub.s32 16, 16
      %159 = vsyncadd [#allocation5], %s158
      %s161 = sshll.u32 %s2, 4
      %s162 = int_to_ptr.vmem [resolvable:$true] %s161
      %164 = dma.smem_to_vmem [#allocation4], 16, %s162, [#allocation5]
    $region21: #{centernet_focal_loss.1} parent=1 // pred_fallthru
      _
    // Predicated region
    $region22: #{centernet_focal_loss.1} parent=1 // pred_check
      _
    $region23: #{centernet_focal_loss.1} parent=1 // pred_check_branch
      %166 = sbr.rel (0) target = $region25
    $region24: #{centernet_focal_loss.1} parent=1 // pred_region
      %167 = dma.done [#allocation5], 16
    $region25: #{centernet_focal_loss.1} parent=1 // pred_fallthru
      _
    %168 = sfence
    %169 = vsyncpa [#allocation5], 1

</llo_original>
